<compile_context>
chip_gen: v5e
topology: v5e:2x2
jax: 0.10.0
libtpu: 0.0.40
codegen_flags: <defaults>
</compile_context>

<pallas_src>
import functools
import math

import jax
import jax.numpy as jnp
import numpy as np
from jax.experimental import pallas as pl
from jax.experimental.pallas import tpu as pltpu

_EPS = 1e-8
_LANE = 128


def _bce_kernel(x_ref, t_ref, o_ref, *, pos_weight, n_valid, block_rows):
    i = pl.program_id(0)

    @pl.when(i == 0)
    def _init():
        o_ref[...] = jnp.zeros_like(o_ref)

    x = x_ref[...]                                   # [TM, 128] f32
    t = t_ref[...]
    loss = -(pos_weight * t * jnp.log(x + _EPS)
             + (1.0 - t) * jnp.log(1.0 - x + _EPS))

    # Mask out the padded tail (flat index >= n_valid contributes 0).
    row = jax.lax.broadcasted_iota(jnp.int32, loss.shape, 0)
    lane = jax.lax.broadcasted_iota(jnp.int32, loss.shape, 1)
    flat_idx = (i * block_rows + row) * _LANE + lane
    loss = jnp.where(flat_idx < n_valid, loss, 0.0)

    # Accumulate the partial sum into the resident (1,1) output block.
    o_ref[...] = o_ref[...] + jnp.sum(loss)

    @pl.when(i == pl.num_programs(0) - 1)
    def _finalize():
        o_ref[...] = o_ref[...] * (1.0 / n_valid)


def _round_up(a, b):
    return (a + b - 1) // b * b


def binary_ce_loss(inp, target, pos_weight=1.0, *, max_block_rows=1024):
    """Pallas equivalent of the PyTorch binary_ce_loss.forward (returns scalar f32)."""
    assert inp.shape == target.shape, (inp.shape, target.shape)
    n = math.prod(inp.shape)

    rows = -(-n // _LANE)                            # ceil(n / 128)
    block_rows = min(max_block_rows, _round_up(rows, 8))
    rows_p = _round_up(rows, block_rows)
    pad = rows_p * _LANE - n

    x = jnp.pad(inp.reshape(-1).astype(jnp.float32), (0, pad)).reshape(rows_p, _LANE)
    t = jnp.pad(target.reshape(-1).astype(jnp.float32), (0, pad)).reshape(rows_p, _LANE)

    grid = rows_p // block_rows
    out = pl.pallas_call(
        functools.partial(_bce_kernel, pos_weight=float(pos_weight),
                          n_valid=n, block_rows=block_rows),
        grid=(grid,),
        in_specs=[
            pl.BlockSpec((block_rows, _LANE), lambda i: (i, 0)),
            pl.BlockSpec((block_rows, _LANE), lambda i: (i, 0)),
        ],
        out_specs=pl.BlockSpec((1, 1), lambda i: (0, 0)),
        out_shape=jax.ShapeDtypeStruct((1, 1), jnp.float32),
        compiler_params=pltpu.CompilerParams(
            dimension_semantics=("arbitrary",)),     # reduction axis
    )(x, t)
    return out[0, 0]


def _reference(inp, target, pos_weight=1.0):
    x = inp.reshape(inp.shape[0], -1).astype(jnp.float32)
    t = target.reshape(target.shape[0], -1).astype(jnp.float32)
    loss = -(pos_weight * t * jnp.log(x + _EPS) + (1.0 - t) * jnp.log(1.0 - x + _EPS))
    return jnp.mean(loss)


if __name__ == "__main__":
    key = jax.random.PRNGKey(0)
    k1, k2, k3, k4 = jax.random.split(key, 4)

    # Small shapes consistent with the module: predictions in (0,1), binary targets.
    B, C, H, W = 2, 4, 16, 16
    inp = jax.random.uniform(k1, (B, C, H, W), jnp.float32,
                             minval=1e-4, maxval=1.0 - 1e-4)
    target = jax.random.bernoulli(k2, 0.5, (B, C, H, W)).astype(jnp.float32)

    loss_fn = jax.jit(functools.partial(binary_ce_loss, pos_weight=1.0))
    loss = loss_fn(inp, target)
    jax.block_until_ready(loss)

    ref = _reference(inp, target, pos_weight=1.0)
    assert np.allclose(np.asarray(loss), np.asarray(ref), rtol=1e-5, atol=1e-6), (loss, ref)

    # Second case with a ragged size (exercises the padded-tail mask) and pos_weight != 1.
    inp2 = jax.random.uniform(k3, (2, 7, 13), jnp.float32, minval=1e-4, maxval=1.0 - 1e-4)
    tgt2 = jax.random.bernoulli(k4, 0.3, (2, 7, 13)).astype(jnp.float32)
    loss2 = jax.jit(functools.partial(binary_ce_loss, pos_weight=2.5))(inp2, tgt2)
    jax.block_until_ready(loss2)
    ref2 = _reference(inp2, tgt2, pos_weight=2.5)
    assert np.allclose(np.asarray(loss2), np.asarray(ref2), rtol=1e-5, atol=1e-6), (loss2, ref2)

    print("KERNEL_OK")
</pallas_src>

<mosaic_0001>
module attributes {stable_mosaic.version = 11 : i64} {
  func.func @_bce_kernel(%arg0: i32, %arg1: memref<16x128xf32, #tpu.memory_space<vmem>>, %arg2: memref<16x128xf32, #tpu.memory_space<vmem>>, %arg3: memref<1x1xf32, #tpu.memory_space<vmem>>) attributes {dimension_semantics = [#tpu.dimension_semantics<arbitrary>], iteration_bounds = array<i64: 1>, scalar_prefetch = 0 : i64, scratch_operands = 0 : i64, tpu.core_type = #tpu.core_type<tc>, window_params = [{transform_indices = @transform_0, window_bounds = array<i64: 16, 128>}, {transform_indices = @transform_1, window_bounds = array<i64: 16, 128>}, {pipeline_mode = #tpu.pipeline_mode<synchronous>, transform_indices = @transform_2, window_bounds = array<i64: 1, 1>}]} {
    %c0_i32 = arith.constant 0 : i32
    %0 = arith.cmpi eq, %arg0, %c0_i32 : i32
    %1 = arith.extui %0 : i1 to i32
    %c0_i32_0 = arith.constant 0 : i32
    %2 = arith.cmpi ne, %1, %c0_i32_0 : i32
    scf.if %2 {
      %cst_17 = arith.constant 0.000000e+00 : f32
      %45 = vector.broadcast %cst_17 : f32 to vector<1x1xf32>
      %c0_18 = arith.constant 0 : index
      %c0_19 = arith.constant 0 : index
      %46 = vector.load %arg3[%c0_18, %c0_19] : memref<1x1xf32, #tpu.memory_space<vmem>>, vector<1x1xf32>
      tpu.vector_store %arg3[%c0_18, %c0_19], %45 {strides = array<i32>} : memref<1x1xf32, #tpu.memory_space<vmem>>, vector<1x1xf32>,
    } else {
    }
    %c0 = arith.constant 0 : index
    %c0_1 = arith.constant 0 : index
    %3 = vector.load %arg1[%c0, %c0_1] : memref<16x128xf32, #tpu.memory_space<vmem>>, vector<16x128xf32>
    %c0_2 = arith.constant 0 : index
    %c0_3 = arith.constant 0 : index
    %4 = vector.load %arg2[%c0_2, %c0_3] : memref<16x128xf32, #tpu.memory_space<vmem>>, vector<16x128xf32>
    %cst = arith.constant 1.000000e+00 : f32
    %5 = vector.broadcast %cst : f32 to vector<16x128xf32>
    %6 = arith.mulf %5, %4 : vector<16x128xf32>
    %cst_4 = arith.constant 9.99999993E-9 : f32
    %7 = vector.broadcast %cst_4 : f32 to vector<16x128xf32>
    %8 = arith.addf %3, %7 : vector<16x128xf32>
    %9 = math.log %8 : vector<16x128xf32>
    %10 = arith.mulf %6, %9 : vector<16x128xf32>
    %cst_5 = arith.constant 1.000000e+00 : f32
    %11 = vector.broadcast %cst_5 : f32 to vector<16x128xf32>
    %12 = arith.subf %11, %4 : vector<16x128xf32>
    %cst_6 = arith.constant 1.000000e+00 : f32
    %13 = vector.broadcast %cst_6 : f32 to vector<16x128xf32>
    %14 = arith.subf %13, %3 : vector<16x128xf32>
    %cst_7 = arith.constant 9.99999993E-9 : f32
    %15 = vector.broadcast %cst_7 : f32 to vector<16x128xf32>
    %16 = arith.addf %14, %15 : vector<16x128xf32>
    %17 = math.log %16 : vector<16x128xf32>
    %18 = arith.mulf %12, %17 : vector<16x128xf32>
    %19 = arith.addf %10, %18 : vector<16x128xf32>
    %cst_8 = arith.constant 0.000000e+00 : f32
    %20 = vector.broadcast %cst_8 : f32 to vector<16x128xf32>
    %21 = arith.subf %20, %19 : vector<16x128xf32>
    %22 = tpu.iota {dimensions = array<i32: 0>} : vector<16x128xi32>
    %23 = tpu.iota {dimensions = array<i32: 1>} : vector<16x128xi32>
    %c16_i32 = arith.constant 16 : i32
    %24 = arith.muli %arg0, %c16_i32 : i32
    %25 = vector.broadcast %24 : i32 to vector<16x128xi32>
    %26 = arith.addi %25, %22 : vector<16x128xi32>
    %c128_i32 = arith.constant 128 : i32
    %27 = vector.broadcast %c128_i32 : i32 to vector<16x128xi32>
    %28 = arith.muli %26, %27 : vector<16x128xi32>
    %29 = arith.addi %28, %23 : vector<16x128xi32>
    %c2048_i32 = arith.constant 2048 : i32
    %30 = vector.broadcast %c2048_i32 : i32 to vector<16x128xi32>
    %31 = arith.cmpi slt, %29, %30 : vector<16x128xi32>
    %cst_9 = arith.constant 0.000000e+00 : f32
    %32 = vector.broadcast %cst_9 : f32 to vector<16x128xf32>
    %33 = arith.select %31, %21, %32 : vector<16x128xi1>, vector<16x128xf32>
    %c0_10 = arith.constant 0 : index
    %c0_11 = arith.constant 0 : index
    %34 = vector.load %arg3[%c0_10, %c0_11] : memref<1x1xf32, #tpu.memory_space<vmem>>, vector<1x1xf32>
    %35 = vector.shape_cast %33 : vector<16x128xf32> to vector<1x16x128xf32>
    %cst_12 = arith.constant dense<0.000000e+00> : vector<1xf32>
    %36 = vector.multi_reduction <add>, %35, %cst_12 [1, 2] : vector<1x16x128xf32> to vector<1xf32>
    %37 = vector.shape_cast %36 : vector<1xf32> to vector<1x1x1xf32>
    %38 = vector.extract %37[0, 0, 0] : f32 from vector<1x1x1xf32>
    %39 = vector.broadcast %38 : f32 to vector<1x1xf32>
    %40 = arith.addf %34, %39 : vector<1x1xf32>
    %c0_13 = arith.constant 0 : index
    %c0_14 = arith.constant 0 : index
    %41 = vector.load %arg3[%c0_13, %c0_14] : memref<1x1xf32, #tpu.memory_space<vmem>>, vector<1x1xf32>
    tpu.vector_store %arg3[%c0_13, %c0_14], %40 {strides = array<i32>} : memref<1x1xf32, #tpu.memory_space<vmem>>, vector<1x1xf32>,
    %c0_i32_15 = arith.constant 0 : i32
    %42 = arith.cmpi eq, %arg0, %c0_i32_15 : i32
    %43 = arith.extui %42 : i1 to i32
    %c0_i32_16 = arith.constant 0 : i32
    %44 = arith.cmpi ne, %43, %c0_i32_16 : i32
    scf.if %44 {
      %c0_17 = arith.constant 0 : index
      %c0_18 = arith.constant 0 : index
      %45 = vector.load %arg3[%c0_17, %c0_18] : memref<1x1xf32, #tpu.memory_space<vmem>>, vector<1x1xf32>
      %cst_19 = arith.constant 4.8828125E-4 : f32
      %46 = vector.broadcast %cst_19 : f32 to vector<1x1xf32>
      %47 = arith.mulf %45, %46 : vector<1x1xf32>
      %c0_20 = arith.constant 0 : index
      %c0_21 = arith.constant 0 : index
      %48 = vector.load %arg3[%c0_20, %c0_21] : memref<1x1xf32, #tpu.memory_space<vmem>>, vector<1x1xf32>
      tpu.vector_store %arg3[%c0_20, %c0_21], %47 {strides = array<i32>} : memref<1x1xf32, #tpu.memory_space<vmem>>, vector<1x1xf32>,
    } else {
    }
    return
  }
  func.func @transform_0(%arg0: i32) -> (i32, i32) {
    %c0_i32 = arith.constant 0 : i32
    %c0_i32_0 = arith.constant 0 : i32
    return %arg0, %c0_i32 : i32, i32
  }
  func.func @transform_1(%arg0: i32) -> (i32, i32) {
    %c0_i32 = arith.constant 0 : i32
    %c0_i32_0 = arith.constant 0 : i32
    return %arg0, %c0_i32 : i32, i32
  }
  func.func @transform_2(%arg0: i32) -> (i32, i32) {
    %c0_i32 = arith.constant 0 : i32
    %c0_i32_0 = arith.constant 0 : i32
    %c0_i32_1 = arith.constant 0 : i32
    return %c0_i32, %c0_i32_0 : i32, i32
  }
}

</mosaic_0001>

<llo_original>
// kernel: binary_ce_loss.1
$region0: #{binary_ce_loss.1}
  #allocation0 [shape = 'u32[]', space=smem, size = 0x4, offset = 0x4, fixed_abs, tag = 'smem constant byte address 0x4 - core index']
  #allocation1 [shape = 'u32[72,128]{1,0:T(1,128)}', space=vmem, size = 0x9000, scoped, tag = 'internal scratch']
  %s0 = inlined_call_operand.vmem [shape: f32[16,128], index: 0, kind: input, shape index: {}]
  %s1 = inlined_call_operand.vmem [shape: f32[16,128], index: 1, kind: input, shape index: {}]
  %s2 = inlined_call_operand.hbm [shape: f32[1,1], index: 2, kind: output, shape index: {}]
  %s3 = sld [smem:[#allocation0]]
  $region26: #{binary_ce_loss.1} parent=0
    _
  %s5 = ssub.s32 1, %s3
  %s6 = scalar_select 0, %s5, %s3
  $region1: #{binary_ce_loss.1} parent=0
    #allocation2 [shape = 'u8[512]{0}', space=vmem, size = 0x400, scoped, tag = 'output window, operand 0, single buffered']
    #allocation3 [shape = 's32[1]{0}', space=sflag, size = 0x4, scoped, tag = 'scoped memory for binary_ce_loss.1']
    %7 = vsyncpa [#allocation3], 0
    // Predicated region
    $region2: #{binary_ce_loss.1} parent=1 // pred_check
      _
    $region3: #{binary_ce_loss.1} parent=1 // pred_check_branch
      %9 = sbr.rel (0) target = $region5
    $region4: #{binary_ce_loss.1} parent=1 // pred_region
      _
    $region5: #{binary_ce_loss.1} parent=1 // pred_fallthru
      _
    // Predicated region
    $region6: #{binary_ce_loss.1} parent=1 // pred_check
      _
    $region7: #{binary_ce_loss.1} parent=1 // pred_check_branch
      %11 = sbr.rel (0) target = $region9
    $region8: #{binary_ce_loss.1} parent=1 // pred_region
      _
    $region9: #{binary_ce_loss.1} parent=1 // pred_fallthru
      _
    %p12 = scmp.eq.s32.totalorder 0, 0
    // Predicated region
    $region10: #{binary_ce_loss.1} parent=1 // pred_check
      %p13 = pneg %p12
    $region11: #{binary_ce_loss.1} parent=1 // pred_check_branch
      %15 = sbr.rel (%p13) target = $region13
    $region12: #{binary_ce_loss.1} parent=1 // pred_region
      %vm16 = vcmask 0
      %17 = vst.msk [vmem:[#allocation2] sm:$0x1] %vm16, 0.0
    $region13: #{binary_ce_loss.1} parent=1 // pred_fallthru
      _
    %v18 = vld [vmem:[%s0] sm:$0xff]
    %v19 = vld [vmem:[%s0 + $0x8] sm:$0xff]
    %v20 = vld [vmem:[%s1] sm:$0xff]
    %v21 = vld [vmem:[%s1 + $0x8] sm:$0xff]
    %v22 = vadd.f32 %v18, 1e-08
    %v23 = vadd.f32 %v19, 1e-08
    %v24 = vlog2.pop %v22
    %v25 = vmul.f32 %v24, 0.6931472
    %v26 = vlog2.pop %v23
    %v27 = vmul.f32 %v26, 0.6931472
    %v28 = vmul.f32 %v20, %v25
    %v29 = vmul.f32 %v21, %v27
    %v30 = vsub.f32 1.0, %v20
    %v31 = vsub.f32 1.0, %v21
    %v32 = vsub.f32 1.0, %v18
    %v33 = vsub.f32 1.0, %v19
    %v34 = vadd.f32 %v32, 1e-08
    %v35 = vadd.f32 %v33, 1e-08
    %v36 = vlog2.pop %v34
    %v37 = vmul.f32 %v36, 0.6931472
    %v38 = vlog2.pop %v35
    %v39 = vmul.f32 %v38, 0.6931472
    %v40 = vmul.f32 %v30, %v37
    %v41 = vmul.f32 %v31, %v39
    %v42 = vadd.f32 %v28, %v40
    %v43 = vadd.f32 %v29, %v41
    %v44 = vsub.f32 0.0, %v42
    %v45 = vsub.f32 0.0, %v43
    %v46 = vlaneseq
    %v47 = vshrl.u32 %v46, 7
    %v48 = vadd.s32 %v47, 8
    %v49 = vlaneseq
    %v50 = vand.u32 %v49, 127
    %s51 = smul.u32 0, 16
    %v52 = vstv %s51
    %v53 = vadd.s32 %v52, %v47
    %v54 = vadd.s32 %v52, %v48
    %v55 = vmul.u32 %v53, 128
    %v56 = vmul.u32 %v54, 128
    %v57 = vadd.s32 %v55, %v50
    %v58 = vadd.s32 %v56, %v50
    %vm59 = vcmp.lt.s32.totalorder %v57, 2048
    %vm60 = vcmp.lt.s32.totalorder %v58, 2048
    %v61 = vsel %vm59, %v44, 0.0
    %v62 = vsel %vm60, %v45, 0.0
    %v63 = vld [vmem:[#allocation2] sm:$0x1]
    %v64 = vadd.f32 %v61, %v62
    %65 = vadd.xlane.f32.xlu0 %v64
    %v66 = vpop.xlane.xlu0 %65
    %v67 = vrot.slane %v66, 4
    %v68 = vadd.f32 %v66, %v67
    %v69 = vrot.slane %v68, 2
    %v70 = vadd.f32 %v68, %v69
    %v71 = vrot.slane %v70, 1
    %v72 = vadd.f32 %v70, %v71
    %s73 = vtos %v72
    %v74 = vstv %s73
    %v75 = vadd.f32 %v63, %v74
    %vm76 = vcmask 0
    %77 = vst.msk [vmem:[#allocation2] sm:$0x1] %vm76, %v75
    // Predicated region
    $region14: #{binary_ce_loss.1} parent=1 // pred_check
      %p78 = pneg %p12
    $region15: #{binary_ce_loss.1} parent=1 // pred_check_branch
      %80 = sbr.rel (%p78) target = $region17
    $region16: #{binary_ce_loss.1} parent=1 // pred_region
      %v81 = vld [vmem:[#allocation2] sm:$0x1]
      %v82 = vmul.f32 %v81, 0.00048828125
      %83 = vst.msk [vmem:[#allocation2] sm:$0x1] %vm76, %v82
    $region17: #{binary_ce_loss.1} parent=1 // pred_fallthru
      _
    // Predicated region
    $region18: #{binary_ce_loss.1} parent=1 // pred_check
      _
    $region19: #{binary_ce_loss.1} parent=1 // pred_check_branch
      %85 = sbr.rel (0) target = $region21
    $region20: #{binary_ce_loss.1} parent=1 // pred_region
      %87 = vsyncadd [#allocation3], 0
      %s89 = sshll.u32 [#allocation2], 4
      %s90 = int_to_ptr.vmem [resolvable:$true] %s89
      %s91 = sshll.u32 %s2, 4
      %s92 = int_to_ptr.hbm [resolvable:$true] %s91
      %94 = dma.vmem_to_hbm [thread:$0]  %s90, 16, %s92, [#allocation3]
    $region21: #{binary_ce_loss.1} parent=1 // pred_fallthru
      _
    // Predicated region
    $region22: #{binary_ce_loss.1} parent=1 // pred_check
      _
    $region23: #{binary_ce_loss.1} parent=1 // pred_check_branch
      %96 = sbr.rel (0) target = $region25
    $region24: #{binary_ce_loss.1} parent=1 // pred_region
      %98 = dma.done [#allocation3], 16
    $region25: #{binary_ce_loss.1} parent=1 // pred_fallthru
      _
    %99 = vsyncpa [#allocation3], 1

</llo_original>
